<compile_context>
chip_gen: v5e
topology: v5e:2x2
jax: 0.10.0
libtpu: 0.0.40
codegen_flags: <defaults>
</compile_context>

<pallas_src>
import jax
import jax.numpy as jnp
from jax.experimental import pallas as pl
from jax.experimental.pallas import tpu as pltpu


def biaffine_kernel(x1_ref, x2_ref, wb2d_ref, red_ref, wl1_ref, wl2_ref, b_ref, out_ref):
    """x1_ref, x2_ref: (TN, D); wb2d_ref: (D, O*D); red_ref: (O*D, O);
    wl1_ref, wl2_ref: (D, O); b_ref: (1, O); out_ref: (TN, O)."""
    x1 = x1_ref[...]                       # (TN, D)
    x2 = x2_ref[...]                       # (TN, D)
    n_out = red_ref.shape[1]               # O (static)

    # Bilinear, fused: one wide matmul + VPU multiply + MXU segment-reduce.
    #   t[n, o*D + j]   = sum_i x1[n, i] * Wb[o, i, j]
    #   prod[n, o*D+j]  = t[n, o*D+j] * x2[n, j]
    #   bil[n, o]       = sum_j prod[n, o*D + j]        (via block-diag ones matmul)
    t = jnp.dot(x1, wb2d_ref[...], preferred_element_type=jnp.float32)      # (TN, O*D)
    prod = t * jnp.tile(x2, (1, n_out))                                     # (TN, O*D)
    bil = jnp.dot(prod, red_ref[...], preferred_element_type=jnp.float32)   # (TN, O)

    # Linear part: cat(x1, x2) @ Wl.T + b  ==  x1 @ Wl1 + x2 @ Wl2 + b
    lin = (
        jnp.dot(x1, wl1_ref[...], preferred_element_type=jnp.float32)
        + jnp.dot(x2, wl2_ref[...], preferred_element_type=jnp.float32)
        + b_ref[...]
    )

    out_ref[...] = (bil + lin).astype(out_ref.dtype)


def biaffine_attention(x1, x2, w_bilinear, w_linear, b_linear, *, tile_n=512):
    """x1, x2: (N, D); w_bilinear: (O, D, D); w_linear: (O, 2D); b_linear: (O,)."""
    n, d = x1.shape
    o = w_bilinear.shape[0]

    # (O, D, D) -> (D, O*D). Must be transpose(1, 0, 2) then reshape so that
    # wb2d[i, o*D + j] == w_bilinear[o, i, j] (a plain reshape would be wrong).
    wb2d = jnp.transpose(w_bilinear, (1, 0, 2)).reshape(d, o * d)
    # Block-diagonal ones (O*D, O): reduce each D-wide segment on the MXU.
    red = jnp.kron(jnp.eye(o, dtype=wb2d.dtype), jnp.ones((d, 1), dtype=wb2d.dtype))
    # Linear weight split into x1 / x2 halves, stored transposed as (D, O).
    wl1 = jnp.transpose(w_linear[:, :d])
    wl2 = jnp.transpose(w_linear[:, d:])
    b2d = b_linear.reshape(1, o)

    tn = min(tile_n, n)
    grid = (pl.cdiv(n, tn),)

    row_map = lambda i: (i, 0)     # x1/x2/out tiles march over N
    const_map = lambda i: (0, 0)   # weights/bias stay resident in VMEM

    return pl.pallas_call(
        biaffine_kernel,
        out_shape=jax.ShapeDtypeStruct((n, o), x1.dtype),
        grid_spec=pltpu.PrefetchScalarGridSpec(
            num_scalar_prefetch=0,
            grid=grid,
            in_specs=[
                pl.BlockSpec((tn, d), row_map),        # x1
                pl.BlockSpec((tn, d), row_map),        # x2
                pl.BlockSpec((d, o * d), const_map),   # fused bilinear weight
                pl.BlockSpec((o * d, o), const_map),   # block-diag reduce matrix
                pl.BlockSpec((d, o), const_map),       # Wl1
                pl.BlockSpec((d, o), const_map),       # Wl2
                pl.BlockSpec((1, o), const_map),       # bias
            ],
            out_specs=pl.BlockSpec((tn, o), row_map),
        ),
        compiler_params=pltpu.CompilerParams(
            dimension_semantics=("parallel",),         # v7x: shard N tiles across 2 TCs
        ),
    )(x1, x2, wb2d, red, wl1, wl2, b2d)


def biaffine_reference(x1, x2, w_bilinear, w_linear, b_linear):
    """Plain-JAX reference matching torch.nn.Bilinear + torch.nn.Linear semantics."""
    bil = jnp.einsum("ni,oij,nj->no", x1, w_bilinear, x2)
    lin = jnp.concatenate([x1, x2], axis=-1) @ w_linear.T + b_linear
    return bil + lin


if __name__ == "__main__":
    # Small but grid-exercising shapes: N=256 rows, D=32 features, O=4 relation classes.
    N, D, O = 256, 32, 4

    key = jax.random.PRNGKey(0)
    k1, k2, k3, k4, k5 = jax.random.split(key, 5)

    x1 = jax.random.normal(k1, (N, D), dtype=jnp.float32)
    x2 = jax.random.normal(k2, (N, D), dtype=jnp.float32)

    # Parameter init mimicking PyTorch defaults:
    # Bilinear: U(-1/sqrt(D), 1/sqrt(D)); Linear: U(-1/sqrt(2D), 1/sqrt(2D)).
    bound_b = 1.0 / jnp.sqrt(jnp.float32(D))
    bound_l = 1.0 / jnp.sqrt(jnp.float32(2 * D))
    w_bilinear = jax.random.uniform(k3, (O, D, D), jnp.float32, -bound_b, bound_b)
    w_linear = jax.random.uniform(k4, (O, 2 * D), jnp.float32, -bound_l, bound_l)
    b_linear = jax.random.uniform(k5, (O,), jnp.float32, -bound_l, bound_l)

    # tile_n=128 -> grid of 2 tiles, exercising the pipelined, parallel N axis.
    out = biaffine_attention(x1, x2, w_bilinear, w_linear, b_linear, tile_n=128)
    out = jax.block_until_ready(out)

    ref = biaffine_reference(x1, x2, w_bilinear, w_linear, b_linear)
    assert out.shape == (N, O)
    assert jnp.allclose(out, ref, atol=1e-3, rtol=1e-3), "kernel mismatch vs reference"

    print("KERNEL_OK")
</pallas_src>

<mosaic_0001>
module attributes {stable_mosaic.version = 11 : i64} {
  func.func @biaffine_kernel(%arg0: i32, %arg1: memref<128x32xf32, #tpu.memory_space<vmem>>, %arg2: memref<128x32xf32, #tpu.memory_space<vmem>>, %arg3: memref<32x128xf32, #tpu.memory_space<vmem>>, %arg4: memref<128x4xf32, #tpu.memory_space<vmem>>, %arg5: memref<32x4xf32, #tpu.memory_space<vmem>>, %arg6: memref<32x4xf32, #tpu.memory_space<vmem>>, %arg7: memref<1x4xf32, #tpu.memory_space<vmem>>, %arg8: memref<128x4xf32, #tpu.memory_space<vmem>>) attributes {dimension_semantics = [#tpu.dimension_semantics<parallel>], iteration_bounds = array<i64: 2>, scalar_prefetch = 0 : i64, scratch_operands = 0 : i64, tpu.core_type = #tpu.core_type<tc>, window_params = [{transform_indices = @transform_0, window_bounds = array<i64: 128, 32>}, {transform_indices = @transform_1, window_bounds = array<i64: 128, 32>}, {pipeline_mode = #tpu.pipeline_mode<synchronous>, transform_indices = @transform_2, window_bounds = array<i64: 32, 128>}, {pipeline_mode = #tpu.pipeline_mode<synchronous>, transform_indices = @transform_3, window_bounds = array<i64: 128, 4>}, {pipeline_mode = #tpu.pipeline_mode<synchronous>, transform_indices = @transform_4, window_bounds = array<i64: 32, 4>}, {pipeline_mode = #tpu.pipeline_mode<synchronous>, transform_indices = @transform_5, window_bounds = array<i64: 32, 4>}, {pipeline_mode = #tpu.pipeline_mode<synchronous>, transform_indices = @transform_6, window_bounds = array<i64: 1, 4>}, {transform_indices = @transform_7, window_bounds = array<i64: 128, 4>}]} {
    %c0 = arith.constant 0 : index
    %c0_0 = arith.constant 0 : index
    %0 = vector.load %arg1[%c0, %c0_0] : memref<128x32xf32, #tpu.memory_space<vmem>>, vector<128x32xf32>
    %c0_1 = arith.constant 0 : index
    %c0_2 = arith.constant 0 : index
    %1 = vector.load %arg2[%c0_1, %c0_2] : memref<128x32xf32, #tpu.memory_space<vmem>>, vector<128x32xf32>
    %c0_3 = arith.constant 0 : index
    %c0_4 = arith.constant 0 : index
    %2 = vector.load %arg3[%c0_3, %c0_4] : memref<32x128xf32, #tpu.memory_space<vmem>>, vector<32x128xf32>
    %cst = arith.constant dense<0.000000e+00> : vector<128x128xf32>
    %3 = tpu.matmul %0, %2, %cst {dimension_numbers = #tpu.dot_dimension_numbers<[1], [0], [0], [1], [0, 0, 1, 1], [], []>} : vector<128x32xf32>, vector<32x128xf32>, vector<128x128xf32> -> vector<128x128xf32>
    %4 = tpu.concatenate %1, %1, %1, %1 in 1 : vector<128x32xf32>, vector<128x32xf32>, vector<128x32xf32>, vector<128x32xf32> -> vector<128x128xf32>
    %5 = arith.mulf %3, %4 : vector<128x128xf32>
    %c0_5 = arith.constant 0 : index
    %c0_6 = arith.constant 0 : index
    %6 = vector.load %arg4[%c0_5, %c0_6] : memref<128x4xf32, #tpu.memory_space<vmem>>, vector<128x4xf32>
    %cst_7 = arith.constant dense<0.000000e+00> : vector<128x4xf32>
    %7 = tpu.matmul %5, %6, %cst_7 {dimension_numbers = #tpu.dot_dimension_numbers<[1], [0], [0], [1], [0, 0, 1, 1], [], []>} : vector<128x128xf32>, vector<128x4xf32>, vector<128x4xf32> -> vector<128x4xf32>
    %c0_8 = arith.constant 0 : index
    %c0_9 = arith.constant 0 : index
    %8 = vector.load %arg5[%c0_8, %c0_9] : memref<32x4xf32, #tpu.memory_space<vmem>>, vector<32x4xf32>
    %cst_10 = arith.constant dense<0.000000e+00> : vector<128x4xf32>
    %9 = tpu.matmul %0, %8, %cst_10 {dimension_numbers = #tpu.dot_dimension_numbers<[1], [0], [0], [1], [0, 0, 1, 1], [], []>} : vector<128x32xf32>, vector<32x4xf32>, vector<128x4xf32> -> vector<128x4xf32>
    %c0_11 = arith.constant 0 : index
    %c0_12 = arith.constant 0 : index
    %10 = vector.load %arg6[%c0_11, %c0_12] : memref<32x4xf32, #tpu.memory_space<vmem>>, vector<32x4xf32>
    %cst_13 = arith.constant dense<0.000000e+00> : vector<128x4xf32>
    %11 = tpu.matmul %1, %10, %cst_13 {dimension_numbers = #tpu.dot_dimension_numbers<[1], [0], [0], [1], [0, 0, 1, 1], [], []>} : vector<128x32xf32>, vector<32x4xf32>, vector<128x4xf32> -> vector<128x4xf32>
    %12 = arith.addf %9, %11 : vector<128x4xf32>
    %c0_14 = arith.constant 0 : index
    %c0_15 = arith.constant 0 : index
    %13 = vector.load %arg7[%c0_14, %c0_15] : memref<1x4xf32, #tpu.memory_space<vmem>>, vector<1x4xf32>
    %14 = vector.broadcast %13 : vector<1x4xf32> to vector<128x4xf32>
    %15 = arith.addf %12, %14 : vector<128x4xf32>
    %16 = arith.addf %7, %15 : vector<128x4xf32>
    %c0_16 = arith.constant 0 : index
    %c0_17 = arith.constant 0 : index
    %17 = vector.load %arg8[%c0_16, %c0_17] : memref<128x4xf32, #tpu.memory_space<vmem>>, vector<128x4xf32>
    tpu.vector_store %arg8[%c0_16, %c0_17], %16 {strides = array<i32>} : memref<128x4xf32, #tpu.memory_space<vmem>>, vector<128x4xf32>,
    return
  }
  func.func @transform_0(%arg0: i32) -> (i32, i32) {
    %c0_i32 = arith.constant 0 : i32
    %c0_i32_0 = arith.constant 0 : i32
    return %arg0, %c0_i32 : i32, i32
  }
  func.func @transform_1(%arg0: i32) -> (i32, i32) {
    %c0_i32 = arith.constant 0 : i32
    %c0_i32_0 = arith.constant 0 : i32
    return %arg0, %c0_i32 : i32, i32
  }
  func.func @transform_2(%arg0: i32) -> (i32, i32) {
    %c0_i32 = arith.constant 0 : i32
    %c0_i32_0 = arith.constant 0 : i32
    %c0_i32_1 = arith.constant 0 : i32
    return %c0_i32, %c0_i32_0 : i32, i32
  }
  func.func @transform_3(%arg0: i32) -> (i32, i32) {
    %c0_i32 = arith.constant 0 : i32
    %c0_i32_0 = arith.constant 0 : i32
    %c0_i32_1 = arith.constant 0 : i32
    return %c0_i32, %c0_i32_0 : i32, i32
  }
  func.func @transform_4(%arg0: i32) -> (i32, i32) {
    %c0_i32 = arith.constant 0 : i32
    %c0_i32_0 = arith.constant 0 : i32
    %c0_i32_1 = arith.constant 0 : i32
    return %c0_i32, %c0_i32_0 : i32, i32
  }
  func.func @transform_5(%arg0: i32) -> (i32, i32) {
    %c0_i32 = arith.constant 0 : i32
    %c0_i32_0 = arith.constant 0 : i32
    %c0_i32_1 = arith.constant 0 : i32
    return %c0_i32, %c0_i32_0 : i32, i32
  }
  func.func @transform_6(%arg0: i32) -> (i32, i32) {
    %c0_i32 = arith.constant 0 : i32
    %c0_i32_0 = arith.constant 0 : i32
    %c0_i32_1 = arith.constant 0 : i32
    return %c0_i32, %c0_i32_0 : i32, i32
  }
  func.func @transform_7(%arg0: i32) -> (i32, i32) {
    %c0_i32 = arith.constant 0 : i32
    %c0_i32_0 = arith.constant 0 : i32
    return %arg0, %c0_i32 : i32, i32
  }
}

</mosaic_0001>

<llo_original>
// kernel: tpu_custom_call.1
$region0: #{tpu_custom_call.1}
  #allocation0 [shape = 'u32[]', space=smem, size = 0x4, offset = 0x4, fixed_abs, tag = 'smem constant byte address 0x4 - core index']
  #allocation1 [shape = 'u32[72,128]{1,0:T(1,128)}', space=vmem, size = 0x9000, scoped, tag = 'internal scratch']
  %s0 = inlined_call_operand.vmem [shape: f32[256,32], index: 0, kind: input, shape index: {}]
  %s1 = inlined_call_operand.vmem [shape: f32[256,32], index: 1, kind: input, shape index: {}]
  %s2 = inlined_call_operand.vmem [shape: f32[32,128], index: 2, kind: input, shape index: {}]
  %s3 = inlined_call_operand.vmem [shape: f32[128,4], index: 3, kind: input, shape index: {}]
  %s4 = inlined_call_operand.vmem [shape: f32[32,4], index: 4, kind: input, shape index: {}]
  %s5 = inlined_call_operand.vmem [shape: f32[32,4], index: 5, kind: input, shape index: {}]
  %s6 = inlined_call_operand.vmem [shape: f32[1,4], index: 6, kind: input, shape index: {}]
  %s7 = inlined_call_operand.vmem [shape: f32[256,4], index: 7, kind: output, shape index: {}]
  %s8 = sld [smem:[#allocation0]]
  $region61: #{tpu_custom_call.1} parent=0
    _
  %s10 = ssub.s32 1, %s8
  %s11 = scalar_select 0, %s10, %s8
  loop: start=0, step=1, limit=4
  $region2: #{tpu_custom_call.1} parent=0 // loop_pre_header
    _
  $region3: #{tpu_custom_call.1} parent=0 // loop_header
    %s13 = sphi 0, %s17
    %p14 = scmp.ge.s32.totalorder %s13, 4
    %s23 = sphi 0, %s25
    %s26 = sphi 0, %s23
    %s27 = sphi 0, %s26
    %s43 = sphi 0, %s27
    %s49 = sphi 0, %s51
    %s52 = sphi 0, %s49
    %s53 = sphi 0, %s52
    %s69 = sphi 0, %s53
    %s73 = sphi 0, %s73
    %s75 = sphi 0, %s73
    %s76 = sphi 0, %s75
    %s90 = sphi 0, %s76
    %s94 = sphi 0, %s94
    %s96 = sphi 0, %s94
    %s97 = sphi 0, %s96
    %s111 = sphi 0, %s97
    %s115 = sphi 0, %s115
    %s117 = sphi 0, %s115
    %s118 = sphi 0, %s117
    %s132 = sphi 0, %s118
    %s136 = sphi 0, %s136
    %s138 = sphi 0, %s136
    %s139 = sphi 0, %s138
    %s153 = sphi 0, %s139
    %s157 = sphi 0, %s157
    %s159 = sphi 0, %s157
    %s160 = sphi 0, %s159
    %s174 = sphi 0, %s160
    %s180 = sphi 0, %s182
    %s183 = sphi 0, %s180
    %s184 = sphi 0, %s183
    %s200 = sphi 0, %s184
  $region4: #{tpu_custom_call.1} parent=0 // loop_header_branch
    %16 = sbr.rel (%p14) target = $region8
  $region5: #{tpu_custom_call.1} parent=0 // loop_body
    %s18 = ssub.s32 %s13, 1
    %s19 = ssub.s32 %s13, 2
    %s20 = sadd.s32 %s13, 1
    %s21 = ssub.s32 %s13, %s20
    %p22 = scmp.eq.s32.totalorder %s21, 0
    %s24 = sadd.s32 %s23, 1
    %s25 = scalar_select %p22, %s23, %s24
    %p28 = pneg %p22
    %p29 = scmp.eq.s32.totalorder %s13, 1
    %p30 = por %p28, %p29
    %p31 = scmp.ne.s32.totalorder %s23, %s26
    %p32 = scmp.eq.s32.totalorder %s13, 0
    %p33 = por %p31, %p32
    %p34 = scmp.ne.s32.totalorder %s23, %s26
    %p35 = scmp.eq.s32.totalorder %s18, 1
    %p36 = por %p34, %p35
    %p37 = scmp.ne.s32.totalorder %s26, %s27
    %p38 = scmp.eq.s32.totalorder %s18, 0
    %p39 = por %p37, %p38
    %p40 = scmp.ne.s32.totalorder %s26, %s27
    %p41 = scmp.eq.s32.totalorder %s19, 1
    %p42 = por %p40, %p41
    %p44 = scmp.ne.s32.totalorder %s27, %s43
    %p45 = scmp.eq.s32.totalorder %s19, 0
    %p46 = por %p44, %p45
    %s47 = ssub.s32 %s13, %s20
    %p48 = scmp.eq.s32.totalorder %s47, 0
    %s50 = sadd.s32 %s49, 1
    %s51 = scalar_select %p48, %s49, %s50
    %p54 = pneg %p48
    %p55 = scmp.eq.s32.totalorder %s13, 1
    %p56 = por %p54, %p55
    %p57 = scmp.ne.s32.totalorder %s49, %s52
    %p58 = scmp.eq.s32.totalorder %s13, 0
    %p59 = por %p57, %p58
    %p60 = scmp.ne.s32.totalorder %s49, %s52
    %p61 = scmp.eq.s32.totalorder %s18, 1
    %p62 = por %p60, %p61
    %p63 = scmp.ne.s32.totalorder %s52, %s53
    %p64 = scmp.eq.s32.totalorder %s18, 0
    %p65 = por %p63, %p64
    %p66 = scmp.ne.s32.totalorder %s52, %s53
    %p67 = scmp.eq.s32.totalorder %s19, 1
    %p68 = por %p66, %p67
    %p70 = scmp.ne.s32.totalorder %s53, %s69
    %p71 = scmp.eq.s32.totalorder %s19, 0
    %p72 = por %p70, %p71
    %s74 = sadd.s32 %s73, 1
    %p77 = scmp.eq.s32.totalorder %s13, 1
    %p78 = scmp.ne.s32.totalorder %s73, %s75
    %p79 = scmp.eq.s32.totalorder %s13, 0
    %p80 = por %p78, %p79
    %p81 = scmp.ne.s32.totalorder %s73, %s75
    %p82 = scmp.eq.s32.totalorder %s18, 1
    %p83 = por %p81, %p82
    %p84 = scmp.ne.s32.totalorder %s75, %s76
    %p85 = scmp.eq.s32.totalorder %s18, 0
    %p86 = por %p84, %p85
    %p87 = scmp.ne.s32.totalorder %s75, %s76
    %p88 = scmp.eq.s32.totalorder %s19, 1
    %p89 = por %p87, %p88
    %p91 = scmp.ne.s32.totalorder %s76, %s90
    %p92 = scmp.eq.s32.totalorder %s19, 0
    %p93 = por %p91, %p92
    %s95 = sadd.s32 %s94, 1
    %p98 = scmp.eq.s32.totalorder %s13, 1
    %p99 = scmp.ne.s32.totalorder %s94, %s96
    %p100 = scmp.eq.s32.totalorder %s13, 0
    %p101 = por %p99, %p100
    %p102 = scmp.ne.s32.totalorder %s94, %s96
    %p103 = scmp.eq.s32.totalorder %s18, 1
    %p104 = por %p102, %p103
    %p105 = scmp.ne.s32.totalorder %s96, %s97
    %p106 = scmp.eq.s32.totalorder %s18, 0
    %p107 = por %p105, %p106
    %p108 = scmp.ne.s32.totalorder %s96, %s97
    %p109 = scmp.eq.s32.totalorder %s19, 1
    %p110 = por %p108, %p109
    %p112 = scmp.ne.s32.totalorder %s97, %s111
    %p113 = scmp.eq.s32.totalorder %s19, 0
    %p114 = por %p112, %p113
    %s116 = sadd.s32 %s115, 1
    %p119 = scmp.eq.s32.totalorder %s13, 1
    %p120 = scmp.ne.s32.totalorder %s115, %s117
    %p121 = scmp.eq.s32.totalorder %s13, 0
    %p122 = por %p120, %p121
    %p123 = scmp.ne.s32.totalorder %s115, %s117
    %p124 = scmp.eq.s32.totalorder %s18, 1
    %p125 = por %p123, %p124
    %p126 = scmp.ne.s32.totalorder %s117, %s118
    %p127 = scmp.eq.s32.totalorder %s18, 0
    %p128 = por %p126, %p127
    %p129 = scmp.ne.s32.totalorder %s117, %s118
    %p130 = scmp.eq.s32.totalorder %s19, 1
    %p131 = por %p129, %p130
    %p133 = scmp.ne.s32.totalorder %s118, %s132
    %p134 = scmp.eq.s32.totalorder %s19, 0
    %p135 = por %p133, %p134
    %s137 = sadd.s32 %s136, 1
    %p140 = scmp.eq.s32.totalorder %s13, 1
    %p141 = scmp.ne.s32.totalorder %s136, %s138
    %p142 = scmp.eq.s32.totalorder %s13, 0
    %p143 = por %p141, %p142
    %p144 = scmp.ne.s32.totalorder %s136, %s138
    %p145 = scmp.eq.s32.totalorder %s18, 1
    %p146 = por %p144, %p145
    %p147 = scmp.ne.s32.totalorder %s138, %s139
    %p148 = scmp.eq.s32.totalorder %s18, 0
    %p149 = por %p147, %p148
    %p150 = scmp.ne.s32.totalorder %s138, %s139
    %p151 = scmp.eq.s32.totalorder %s19, 1
    %p152 = por %p150, %p151
    %p154 = scmp.ne.s32.totalorder %s139, %s153
    %p155 = scmp.eq.s32.totalorder %s19, 0
    %p156 = por %p154, %p155
    %s158 = sadd.s32 %s157, 1
    %p161 = scmp.eq.s32.totalorder %s13, 1
    %p162 = scmp.ne.s32.totalorder %s157, %s159
    %p163 = scmp.eq.s32.totalorder %s13, 0
    %p164 = por %p162, %p163
    %p165 = scmp.ne.s32.totalorder %s157, %s159
    %p166 = scmp.eq.s32.totalorder %s18, 1
    %p167 = por %p165, %p166
    %p168 = scmp.ne.s32.totalorder %s159, %s160
    %p169 = scmp.eq.s32.totalorder %s18, 0
    %p170 = por %p168, %p169
    %p171 = scmp.ne.s32.totalorder %s159, %s160
    %p172 = scmp.eq.s32.totalorder %s19, 1
    %p173 = por %p171, %p172
    %p175 = scmp.ne.s32.totalorder %s160, %s174
    %p176 = scmp.eq.s32.totalorder %s19, 0
    %p177 = por %p175, %p176
    %s178 = ssub.s32 %s13, %s20
    %p179 = scmp.eq.s32.totalorder %s178, 0
    %s181 = sadd.s32 %s180, 1
    %s182 = scalar_select %p179, %s180, %s181
    %p185 = pneg %p179
    %p186 = scmp.eq.s32.totalorder %s13, 1
    %p187 = por %p185, %p186
    %p188 = scmp.ne.s32.totalorder %s180, %s183
    %p189 = scmp.eq.s32.totalorder %s13, 0
    %p190 = por %p188, %p189
    %p191 = scmp.ne.s32.totalorder %s180, %s183
    %p192 = scmp.eq.s32.totalorder %s18, 1
    %p193 = por %p191, %p192
    %p194 = scmp.ne.s32.totalorder %s183, %s184
    %p195 = scmp.eq.s32.totalorder %s18, 0
    %p196 = por %p194, %p195
    %p197 = scmp.ne.s32.totalorder %s183, %s184
    %p198 = scmp.eq.s32.totalorder %s19, 1
    %p199 = por %p197, %p198
    %p201 = scmp.ne.s32.totalorder %s184, %s200
    %p202 = scmp.eq.s32.totalorder %s19, 0
    %p203 = por %p201, %p202
    %p204 = scmp.le.s32.totalorder 1, %s13
    %p205 = scmp.lt.s32.totalorder %s13, 3
    %p206 = pnand %p204, %p205
    %p207 = pneg %p206
    // Predicated region
    $region9: #{tpu_custom_call.1} parent=5 // pred_check
      _
    $region10: #{tpu_custom_call.1} parent=5 // pred_check_branch
      %209 = sbr.rel (%p206) target = $region12
    $region11: #{tpu_custom_call.1} parent=5 // pred_region
      %s210 = ssub.s32 %s13, 1
      // Predicated region
      $region13: #{tpu_custom_call.1} parent=11 // pred_check
        %p211 = pneg %p86
      $region14: #{tpu_custom_call.1} parent=11 // pred_check_branch
        %213 = sbr.rel (%p211) target = $region16
      $region15: #{tpu_custom_call.1} parent=11 // pred_region
        _
      $region16: #{tpu_custom_call.1} parent=11 // pred_fallthru
        _
      // Predicated region
      $region17: #{tpu_custom_call.1} parent=11 // pred_check
        %p214 = pneg %p107
      $region18: #{tpu_custom_call.1} parent=11 // pred_check_branch
        %216 = sbr.rel (%p214) target = $region20
      $region19: #{tpu_custom_call.1} parent=11 // pred_region
        _
      $region20: #{tpu_custom_call.1} parent=11 // pred_fallthru
        _
      // Predicated region
      $region21: #{tpu_custom_call.1} parent=11 // pred_check
        %p217 = pneg %p128
      $region22: #{tpu_custom_call.1} parent=11 // pred_check_branch
        %219 = sbr.rel (%p217) target = $region24
      $region23: #{tpu_custom_call.1} parent=11 // pred_region
        _
      $region24: #{tpu_custom_call.1} parent=11 // pred_fallthru
        _
      // Predicated region
      $region25: #{tpu_custom_call.1} parent=11 // pred_check
        %p220 = pneg %p149
      $region26: #{tpu_custom_call.1} parent=11 // pred_check_branch
        %222 = sbr.rel (%p220) target = $region28
      $region27: #{tpu_custom_call.1} parent=11 // pred_region
        _
      $region28: #{tpu_custom_call.1} parent=11 // pred_fallthru
        _
      // Predicated region
      $region29: #{tpu_custom_call.1} parent=11 // pred_check
        %p223 = pneg %p170
      $region30: #{tpu_custom_call.1} parent=11 // pred_check_branch
        %225 = sbr.rel (%p223) target = $region32
      $region31: #{tpu_custom_call.1} parent=11 // pred_region
        _
      $region32: #{tpu_custom_call.1} parent=11 // pred_fallthru
        _
    $region12: #{tpu_custom_call.1} parent=5 // pred_fallthru
      _
    %p226 = scmp.lt.s32.totalorder %s13, 2
    // Predicated region
    $region33: #{tpu_custom_call.1} parent=5 // pred_check
      %p227 = pneg %p226
    $region34: #{tpu_custom_call.1} parent=5 // pred_check_branch
      %229 = sbr.rel (%p227) target = $region36
    $region35: #{tpu_custom_call.1} parent=5 // pred_region
      // Predicated region
      $region37: #{tpu_custom_call.1} parent=35 // pred_check
        %p230 = pneg %p33
      $region38: #{tpu_custom_call.1} parent=35 // pred_check_branch
        %232 = sbr.rel (%p230) target = $region40
      $region39: #{tpu_custom_call.1} parent=35 // pred_region
        %s233 = smul.u32 16, %s13
        %p234 = scmp.lt.s32.totalorder %s233, 31
        %s235 = scalar_select %p234, %s233, 31
        %s236 = smul.addr %s235, 8
        %s237 = scalar_lea.vmem %s0, %s236
        %s238 = smul.u32 16, %s13
      $region40: #{tpu_custom_call.1} parent=35 // pred_fallthru
        _
      // Predicated region
      $region41: #{tpu_custom_call.1} parent=35 // pred_check
        %p239 = pneg %p59
      $region42: #{tpu_custom_call.1} parent=35 // pred_check_branch
        %241 = sbr.rel (%p239) target = $region44
      $region43: #{tpu_custom_call.1} parent=35 // pred_region
        %s242 = smul.u32 16, %s13
        %p243 = scmp.lt.s32.totalorder %s242, 31
        %s244 = scalar_select %p243, %s242, 31
        %s245 = smul.addr %s244, 8
        %s246 = scalar_lea.vmem %s1, %s245
        %s247 = smul.u32 16, %s13
      $region44: #{tpu_custom_call.1} parent=35 // pred_fallthru
        _
    $region36: #{tpu_custom_call.1} parent=5 // pred_fallthru
      _
    %p248 = scmp.le.s32.totalorder 1, %s13
    %p249 = scmp.lt.s32.totalorder %s13, 3
    %p250 = pnand %p248, %p249
    %p251 = pneg %p250
    // Predicated region
    $region45: #{tpu_custom_call.1} parent=5 // pred_check
      _
    $region46: #{tpu_custom_call.1} parent=5 // pred_check_branch
      %253 = sbr.rel (%p250) target = $region48
    $region47: #{tpu_custom_call.1} parent=5 // pred_region
      %s254 = ssub.s32 %s13, 1
      %s255 = smul.u32 16, %s18
      %p256 = scmp.lt.s32.totalorder %s255, 31
      %s257 = scalar_select %p256, %s255, 31
      %s258 = smul.addr %s257, 8
      %s259 = scalar_lea.vmem %s0, %s258
      %p260 = pneg %p39
      %p261 = pneg %p36
      %s262 = smul.u32 16, %s18
      %p263 = scmp.lt.s32.totalorder %s262, 31
      %s264 = scalar_select %p263, %s262, 31
      %s265 = smul.addr %s264, 8
      %s266 = scalar_lea.vmem %s1, %s265
      %p267 = pneg %p65
      %p268 = pneg %p62
      %p269 = pneg %p86
      %p270 = pneg %p83
      %p271 = pneg %p107
      %p272 = pneg %p104
      %p273 = pneg %p128
      %p274 = pneg %p125
      %p275 = pneg %p149
      %p276 = pneg %p146
      %p277 = pneg %p170
      %p278 = pneg %p167
      %p279 = pneg %p196
      %p280 = pneg %p193
      %s281 = smul.u32 16, %s18
      %p282 = scmp.lt.s32.totalorder %s281, 31
      %s283 = scalar_select %p282, %s281, 31
      %s284 = smul.addr %s283, 8
      %s285 = scalar_lea.vmem %s7, %s284
      %s286 = smul.u32 16, %s18
      %p287 = scmp.lt.s32.totalorder %s286, 31
      %s288 = scalar_select %p287, %s286, 31
      %s289 = smul.addr %s288, 8
      %s290 = scalar_lea.vmem %s0, %s289
      %s291 = smul.u32 16, %s18
      %s292 = smul.u32 16, %s18
      %p293 = scmp.lt.s32.totalorder %s292, 31
      %s294 = scalar_select %p293, %s292, 31
      %s295 = smul.addr %s294, 8
      %s296 = scalar_lea.vmem %s1, %s295
      %s297 = smul.u32 16, %s18
      %s298 = smul.u32 16, %s18
      %p299 = scmp.lt.s32.totalorder %s298, 31
      %s300 = scalar_select %p299, %s298, 31
      %s301 = smul.addr %s300, 8
      %s302 = scalar_lea.vmem %s7, %s301
      %s303 = smul.u32 16, %s18
      %v304 = vld [vmem:[%s290] sm:$0xff]
      %v305 = vld [vmem:[%s290 + $0x8] sm:$0xff]
      %v306 = vld [vmem:[%s290 + $0x10] sm:$0xff]
      %v307 = vld [vmem:[%s290 + $0x18] sm:$0xff]
      %v308 = vld [vmem:[%s290 + $0x20] sm:$0xff]
      %v309 = vld [vmem:[%s290 + $0x28] sm:$0xff]
      %v310 = vld [vmem:[%s290 + $0x30] sm:$0xff]
      %v311 = vld [vmem:[%s290 + $0x38] sm:$0xff]
      %v312 = vld [vmem:[%s290 + $0x40] sm:$0xff]
      %v313 = vld [vmem:[%s290 + $0x48] sm:$0xff]
      %v314 = vld [vmem:[%s290 + $0x50] sm:$0xff]
      %v315 = vld [vmem:[%s290 + $0x58] sm:$0xff]
      %v316 = vld [vmem:[%s290 + $0x60] sm:$0xff]
      %v317 = vld [vmem:[%s290 + $0x68] sm:$0xff]
      %v318 = vld [vmem:[%s290 + $0x70] sm:$0xff]
      %v319 = vld [vmem:[%s290 + $0x78] sm:$0xff]
      %v320 = vld [vmem:[%s296] sm:$0xff]
      %v321 = vld [vmem:[%s296 + $0x8] sm:$0xff]
      %v322 = vld [vmem:[%s296 + $0x10] sm:$0xff]
      %v323 = vld [vmem:[%s296 + $0x18] sm:$0xff]
      %v324 = vld [vmem:[%s296 + $0x20] sm:$0xff]
      %v325 = vld [vmem:[%s296 + $0x28] sm:$0xff]
      %v326 = vld [vmem:[%s296 + $0x30] sm:$0xff]
      %v327 = vld [vmem:[%s296 + $0x38] sm:$0xff]
      %v328 = vld [vmem:[%s296 + $0x40] sm:$0xff]
      %v329 = vld [vmem:[%s296 + $0x48] sm:$0xff]
      %v330 = vld [vmem:[%s296 + $0x50] sm:$0xff]
      %v331 = vld [vmem:[%s296 + $0x58] sm:$0xff]
      %v332 = vld [vmem:[%s296 + $0x60] sm:$0xff]
      %v333 = vld [vmem:[%s296 + $0x68] sm:$0xff]
      %v334 = vld [vmem:[%s296 + $0x70] sm:$0xff]
      %v335 = vld [vmem:[%s296 + $0x78] sm:$0xff]
      %v336 = vld [vmem:[%s2] sm:$0xff]
      %v337 = vld [vmem:[%s2 + $0x8] sm:$0xff]
      %v338 = vld [vmem:[%s2 + $0x10] sm:$0xff]
      %v339 = vld [vmem:[%s2 + $0x18] sm:$0xff]
      %vm340 = vcmask 261120
      %v342 = vsel %vm340, %v304, 0
      %v345 = vsel %vm340, %v305, 0
      %v348 = vsel %vm340, %v306, 0
      %v351 = vsel %vm340, %v307, 0
      %v354 = vsel %vm340, %v308, 0
      %v357 = vsel %vm340, %v309, 0
      %v360 = vsel %vm340, %v310, 0
      %v363 = vsel %vm340, %v311, 0
      %v366 = vsel %vm340, %v312, 0
      %v369 = vsel %vm340, %v313, 0
      %v372 = vsel %vm340, %v314, 0
      %v375 = vsel %vm340, %v315, 0
      %v378 = vsel %vm340, %v316, 0
      %v381 = vsel %vm340, %v317, 0
      %v384 = vsel %vm340, %v318, 0
      %v387 = vsel %vm340, %v319, 0
      %389 = vmatpush.msra.mxu0 0.0
      %390 = vmatpush.msra.mxu0 0.0
      %391 = vmatpush.msra.mxu0 0.0
      %392 = vmatpush.msra.mxu0 0.0
      %393 = vmatpush.msra.mxu0 0.0
      %394 = vmatpush.msra.mxu0 0.0
      %395 = vmatpush.msra.mxu0 0.0
      %396 = vmatpush.msra.mxu0 0.0
      %397 = vmatpush.msra.mxu0 0.0
      %398 = vmatpush.msra.mxu0 0.0
      %399 = vmatpush.msra.mxu0 0.0
      %400 = vmatpush.msra.mxu0 0.0
      %401 = vmatpush.msra.mxu0 %v339
      %402 = vmatpush.msra.mxu0 %v338
      %403 = vmatpush.msra.mxu0 %v337
      %404 = vmatpush.msra.mxu0 %v336
      %405 = vmatmul.f32.gmra.mxu0 %v342
      %v406 = vpop.f32.mrf.mxu0
      %v407 = vadd.f32 0.0, %v406
      %408 = vmatmul.f32.gmra.mxu0 %v345
      %v409 = vpop.f32.mrf.mxu0
      %v410 = vadd.f32 0.0, %v409
      %411 = vmatmul.f32.gmra.mxu0 %v348
      %v412 = vpop.f32.mrf.mxu0
      %v413 = vadd.f32 0.0, %v412
      %414 = vmatmul.f32.gmra.mxu0 %v351
      %v415 = vpop.f32.mrf.mxu0
      %v416 = vadd.f32 0.0, %v415
      %417 = vmatmul.f32.gmra.mxu0 %v354
      %v418 = vpop.f32.mrf.mxu0
      %v419 = vadd.f32 0.0, %v418
      %420 = vmatmul.f32.gmra.mxu0 %v357
      %v421 = vpop.f32.mrf.mxu0
      %v422 = vadd.f32 0.0, %v421
      %423 = vmatmul.f32.gmra.mxu0 %v360
      %v424 = vpop.f32.mrf.mxu0
      %v425 = vadd.f32 0.0, %v424
      %426 = vmatmul.f32.gmra.mxu0 %v363
      %v427 = vpop.f32.mrf.mxu0
      %v428 = vadd.f32 0.0, %v427
      %429 = vmatmul.f32.gmra.mxu0 %v366
      %v430 = vpop.f32.mrf.mxu0
      %v431 = vadd.f32 0.0, %v430
      %432 = vmatmul.f32.gmra.mxu0 %v369
      %v433 = vpop.f32.mrf.mxu0
      %v434 = vadd.f32 0.0, %v433
      %435 = vmatmul.f32.gmra.mxu0 %v372
      %v436 = vpop.f32.mrf.mxu0
      %v437 = vadd.f32 0.0, %v436
      %438 = vmatmul.f32.gmra.mxu0 %v375
      %v439 = vpop.f32.mrf.mxu0
      %v440 = vadd.f32 0.0, %v439
      %441 = vmatmul.f32.gmra.mxu0 %v378
      %v442 = vpop.f32.mrf.mxu0
      %v443 = vadd.f32 0.0, %v442
      %444 = vmatmul.f32.gmra.mxu0 %v381
      %v445 = vpop.f32.mrf.mxu0
      %v446 = vadd.f32 0.0, %v445
      %447 = vmatmul.f32.gmra.mxu0 %v384
      %v448 = vpop.f32.mrf.mxu0
      %v449 = vadd.f32 0.0, %v448
      %450 = vmatmul.f32.gmra.mxu0 %v387
      %v451 = vpop.f32.mrf.mxu0
      %v452 = vadd.f32 0.0, %v451
      %453 = vdwg.mxu0
      %470 = vrot.lane.b32.xlu0 %v320, 32
      %v471 = vpop.permute.xlu0 %470
      %472 = vrot.lane.b32.xlu0 %v321, 32
      %v473 = vpop.permute.xlu0 %472
      %474 = vrot.lane.b32.xlu0 %v322, 32
      %v475 = vpop.permute.xlu0 %474
      %476 = vrot.lane.b32.xlu0 %v323, 32
      %v477 = vpop.permute.xlu0 %476
      %478 = vrot.lane.b32.xlu0 %v324, 32
      %v479 = vpop.permute.xlu0 %478
      %480 = vrot.lane.b32.xlu0 %v325, 32
      %v481 = vpop.permute.xlu0 %480
      %482 = vrot.lane.b32.xlu0 %v326, 32
      %v483 = vpop.permute.xlu0 %482
      %484 = vrot.lane.b32.xlu0 %v327, 32
      %v485 = vpop.permute.xlu0 %484
      %486 = vrot.lane.b32.xlu0 %v328, 32
      %v487 = vpop.permute.xlu0 %486
      %488 = vrot.lane.b32.xlu0 %v329, 32
      %v489 = vpop.permute.xlu0 %488
      %490 = vrot.lane.b32.xlu0 %v330, 32
      %v491 = vpop.permute.xlu0 %490
      %492 = vrot.lane.b32.xlu0 %v331, 32
      %v493 = vpop.permute.xlu0 %492
      %494 = vrot.lane.b32.xlu0 %v332, 32
      %v495 = vpop.permute.xlu0 %494
      %496 = vrot.lane.b32.xlu0 %v333, 32
      %v497 = vpop.permute.xlu0 %496
      %498 = vrot.lane.b32.xlu0 %v334, 32
      %v499 = vpop.permute.xlu0 %498
      %500 = vrot.lane.b32.xlu0 %v335, 32
      %v501 = vpop.permute.xlu0 %500
      %518 = vrot.lane.b32.xlu0 %v320, 64
      %v519 = vpop.permute.xlu0 %518
      %520 = vrot.lane.b32.xlu0 %v321, 64
      %v521 = vpop.permute.xlu0 %520
      %522 = vrot.lane.b32.xlu0 %v322, 64
      %v523 = vpop.permute.xlu0 %522
      %524 = vrot.lane.b32.xlu0 %v323, 64
      %v525 = vpop.permute.xlu0 %524
      %526 = vrot.lane.b32.xlu0 %v324, 64
      %v527 = vpop.permute.xlu0 %526
      %528 = vrot.lane.b32.xlu0 %v325, 64
      %v529 = vpop.permute.xlu0 %528
      %530 = vrot.lane.b32.xlu0 %v326, 64
      %v531 = vpop.permute.xlu0 %530
      %532 = vrot.lane.b32.xlu0 %v327, 64
      %v533 = vpop.permute.xlu0 %532
      %534 = vrot.lane.b32.xlu0 %v328, 64
      %v535 = vpop.permute.xlu0 %534
      %536 = vrot.lane.b32.xlu0 %v329, 64
      %v537 = vpop.permute.xlu0 %536
      %538 = vrot.lane.b32.xlu0 %v330, 64
      %v539 = vpop.permute.xlu0 %538
      %540 = vrot.lane.b32.xlu0 %v331, 64
      %v541 = vpop.permute.xlu0 %540
      %542 = vrot.lane.b32.xlu0 %v332, 64
      %v543 = vpop.permute.xlu0 %542
      %544 = vrot.lane.b32.xlu0 %v333, 64
      %v545 = vpop.permute.xlu0 %544
      %546 = vrot.lane.b32.xlu0 %v334, 64
      %v547 = vpop.permute.xlu0 %546
      %548 = vrot.lane.b32.xlu0 %v335, 64
      %v549 = vpop.permute.xlu0 %548
      %566 = vrot.lane.b32.xlu0 %v320, 96
      %v567 = vpop.permute.xlu0 %566
      %568 = vrot.lane.b32.xlu0 %v321, 96
      %v569 = vpop.permute.xlu0 %568
      %570 = vrot.lane.b32.xlu0 %v322, 96
      %v571 = vpop.permute.xlu0 %570
      %572 = vrot.lane.b32.xlu0 %v323, 96
      %v573 = vpop.permute.xlu0 %572
      %574 = vrot.lane.b32.xlu0 %v324, 96
      %v575 = vpop.permute.xlu0 %574
      %576 = vrot.lane.b32.xlu0 %v325, 96
      %v577 = vpop.permute.xlu0 %576
      %578 = vrot.lane.b32.xlu0 %v326, 96
      %v579 = vpop.permute.xlu0 %578
      %580 = vrot.lane.b32.xlu0 %v327, 96
      %v581 = vpop.permute.xlu0 %580
      %582 = vrot.lane.b32.xlu0 %v328, 96
      %v583 = vpop.permute.xlu0 %582
      %584 = vrot.lane.b32.xlu0 %v329, 96
      %v585 = vpop.permute.xlu0 %584
      %586 = vrot.lane.b32.xlu0 %v330, 96
      %v587 = vpop.permute.xlu0 %586
      %588 = vrot.lane.b32.xlu0 %v331, 96
      %v589 = vpop.permute.xlu0 %588
      %590 = vrot.lane.b32.xlu0 %v332, 96
      %v591 = vpop.permute.xlu0 %590
      %592 = vrot.lane.b32.xlu0 %v333, 96
      %v593 = vpop.permute.xlu0 %592
      %594 = vrot.lane.b32.xlu0 %v334, 96
      %v595 = vpop.permute.xlu0 %594
      %596 = vrot.lane.b32.xlu0 %v335, 96
      %v597 = vpop.permute.xlu0 %596
      %v614 = vsel %vm340, %v320, %v471
      %v615 = vsel %vm340, %v321, %v473
      %v616 = vsel %vm340, %v322, %v475
      %v617 = vsel %vm340, %v323, %v477
      %v618 = vsel %vm340, %v324, %v479
      %v619 = vsel %vm340, %v325, %v481
      %v620 = vsel %vm340, %v326, %v483
      %v621 = vsel %vm340, %v327, %v485
      %v622 = vsel %vm340, %v328, %v487
      %v623 = vsel %vm340, %v329, %v489
      %v624 = vsel %vm340, %v330, %v491
      %v625 = vsel %vm340, %v331, %v493
      %v626 = vsel %vm340, %v332, %v495
      %v627 = vsel %vm340, %v333, %v497
      %v628 = vsel %vm340, %v334, %v499
      %v629 = vsel %vm340, %v335, %v501
      %vm630 = vcmask 523264
      %v631 = vsel %vm630, %v614, %v519
      %v632 = vsel %vm630, %v615, %v521
      %v633 = vsel %vm630, %v616, %v523
      %v634 = vsel %vm630, %v617, %v525
      %v635 = vsel %vm630, %v618, %v527
      %v636 = vsel %vm630, %v619, %v529
      %v637 = vsel %vm630, %v620, %v531
      %v638 = vsel %vm630, %v621, %v533
      %v639 = vsel %vm630, %v622, %v535
      %v640 = vsel %vm630, %v623, %v537
      %v641 = vsel %vm630, %v624, %v539
      %v642 = vsel %vm630, %v625, %v541
      %v643 = vsel %vm630, %v626, %v543
      %v644 = vsel %vm630, %v627, %v545
      %v645 = vsel %vm630, %v628, %v547
      %v646 = vsel %vm630, %v629, %v549
      %vm647 = vcmask 785408
      %v648 = vsel %vm647, %v631, %v567
      %v649 = vsel %vm647, %v632, %v569
      %v650 = vsel %vm647, %v633, %v571
      %v651 = vsel %vm647, %v634, %v573
      %v652 = vsel %vm647, %v635, %v575
      %v653 = vsel %vm647, %v636, %v577
      %v654 = vsel %vm647, %v637, %v579
      %v655 = vsel %vm647, %v638, %v581
      %v656 = vsel %vm647, %v639, %v583
      %v657 = vsel %vm647, %v640, %v585
      %v658 = vsel %vm647, %v641, %v587
      %v659 = vsel %vm647, %v642, %v589
      %v660 = vsel %vm647, %v643, %v591
      %v661 = vsel %vm647, %v644, %v593
      %v662 = vsel %vm647, %v645, %v595
      %v663 = vsel %vm647, %v646, %v597
      %v664 = vmul.f32 %v407, %v648
      %v665 = vmul.f32 %v410, %v649
      %v666 = vmul.f32 %v413, %v650
      %v667 = vmul.f32 %v416, %v651
      %v668 = vmul.f32 %v419, %v652
      %v669 = vmul.f32 %v422, %v653
      %v670 = vmul.f32 %v425, %v654
      %v671 = vmul.f32 %v428, %v655
      %v672 = vmul.f32 %v431, %v656
      %v673 = vmul.f32 %v434, %v657
      %v674 = vmul.f32 %v437, %v658
      %v675 = vmul.f32 %v440, %v659
      %v676 = vmul.f32 %v443, %v660
      %v677 = vmul.f32 %v446, %v661
      %v678 = vmul.f32 %v449, %v662
      %v679 = vmul.f32 %v452, %v663
      %v680 = vld [vmem:[%s3] sm:$0xff]
      %v681 = vld [vmem:[%s3 + $0x8] sm:$0xff]
      %v682 = vld [vmem:[%s3 + $0x10] sm:$0xff]
      %v683 = vld [vmem:[%s3 + $0x18] sm:$0xff]
      %v684 = vld [vmem:[%s3 + $0x20] sm:$0xff]
      %v685 = vld [vmem:[%s3 + $0x28] sm:$0xff]
      %v686 = vld [vmem:[%s3 + $0x30] sm:$0xff]
      %v687 = vld [vmem:[%s3 + $0x38] sm:$0xff]
      %v688 = vld [vmem:[%s3 + $0x40] sm:$0xff]
      %v689 = vld [vmem:[%s3 + $0x48] sm:$0xff]
      %v690 = vld [vmem:[%s3 + $0x50] sm:$0xff]
      %v691 = vld [vmem:[%s3 + $0x58] sm:$0xff]
      %v692 = vld [vmem:[%s3 + $0x60] sm:$0xff]
      %v693 = vld [vmem:[%s3 + $0x68] sm:$0xff]
      %v694 = vld [vmem:[%s3 + $0x70] sm:$0xff]
      %v695 = vld [vmem:[%s3 + $0x78] sm:$0xff]
      %v696 = vld [vmem:[%s4] sm:$0xff]
      %v697 = vld [vmem:[%s4 + $0x8] sm:$0xff]
      %v698 = vld [vmem:[%s4 + $0x10] sm:$0xff]
      %v699 = vld [vmem:[%s4 + $0x18] sm:$0xff]
      %v700 = vld [vmem:[%s5] sm:$0xff]
      %v701 = vld [vmem:[%s5 + $0x8] sm:$0xff]
      %v702 = vld [vmem:[%s5 + $0x10] sm:$0xff]
      %v703 = vld [vmem:[%s5 + $0x18] sm:$0xff]
      %v704 = vsel %vm340, %v320, 0
      %v706 = vsel %vm340, %v321, 0
      %v708 = vsel %vm340, %v322, 0
      %v710 = vsel %vm340, %v323, 0
      %v712 = vsel %vm340, %v324, 0
      %v714 = vsel %vm340, %v325, 0
      %v716 = vsel %vm340, %v326, 0
      %v718 = vsel %vm340, %v327, 0
      %v720 = vsel %vm340, %v328, 0
      %v722 = vsel %vm340, %v329, 0
      %v724 = vsel %vm340, %v330, 0
      %v726 = vsel %vm340, %v331, 0
      %v728 = vsel %vm340, %v332, 0
      %v730 = vsel %vm340, %v333, 0
      %v732 = vsel %vm340, %v334, 0
      %v734 = vsel %vm340, %v335, 0
      %736 = vmatpush.msra.mxu0 0.0
      %737 = vmatpush.msra.mxu0 0.0
      %738 = vmatpush.msra.mxu0 0.0
      %739 = vmatpush.msra.mxu0 0.0
      %740 = vmatpush.msra.mxu0 0.0
      %741 = vmatpush.msra.mxu0 0.0
      %742 = vmatpush.msra.mxu0 0.0
      %743 = vmatpush.msra.mxu0 0.0
      %744 = vmatpush.msra.mxu0 0.0
      %745 = vmatpush.msra.mxu0 0.0
      %746 = vmatpush.msra.mxu0 0.0
      %747 = vmatpush.msra.mxu0 0.0
      %748 = vmatpush.msra.mxu0 %v703
      %749 = vmatpush.msra.mxu0 %v702
      %750 = vmatpush.msra.mxu0 %v701
      %751 = vmatpush.msra.mxu0 %v700
      %752 = vmatmul.f32.gmra.mxu0 %v704
      %v753 = vpop.f32.mrf.mxu0
      %v754 = vadd.f32 0.0, %v753
      %755 = vmatmul.f32.gmra.mxu0 %v706
      %v756 = vpop.f32.mrf.mxu0
      %v757 = vadd.f32 0.0, %v756
      %758 = vmatmul.f32.gmra.mxu0 %v708
      %v759 = vpop.f32.mrf.mxu0
      %v760 = vadd.f32 0.0, %v759
      %761 = vmatmul.f32.gmra.mxu0 %v710
      %v762 = vpop.f32.mrf.mxu0
      %v763 = vadd.f32 0.0, %v762
      %764 = vmatmul.f32.gmra.mxu0 %v712
      %v765 = vpop.f32.mrf.mxu0
      %v766 = vadd.f32 0.0, %v765
      %767 = vmatmul.f32.gmra.mxu0 %v714
      %v768 = vpop.f32.mrf.mxu0
      %v769 = vadd.f32 0.0, %v768
      %770 = vmatmul.f32.gmra.mxu0 %v716
      %v771 = vpop.f32.mrf.mxu0
      %v772 = vadd.f32 0.0, %v771
      %773 = vmatmul.f32.gmra.mxu0 %v718
      %v774 = vpop.f32.mrf.mxu0
      %v775 = vadd.f32 0.0, %v774
      %776 = vmatmul.f32.gmra.mxu0 %v720
      %v777 = vpop.f32.mrf.mxu0
      %v778 = vadd.f32 0.0, %v777
      %779 = vmatmul.f32.gmra.mxu0 %v722
      %v780 = vpop.f32.mrf.mxu0
      %v781 = vadd.f32 0.0, %v780
      %782 = vmatmul.f32.gmra.mxu0 %v724
      %v783 = vpop.f32.mrf.mxu0
      %v784 = vadd.f32 0.0, %v783
      %785 = vmatmul.f32.gmra.mxu0 %v726
      %v786 = vpop.f32.mrf.mxu0
      %v787 = vadd.f32 0.0, %v786
      %788 = vmatmul.f32.gmra.mxu0 %v728
      %v789 = vpop.f32.mrf.mxu0
      %v790 = vadd.f32 0.0, %v789
      %791 = vmatmul.f32.gmra.mxu0 %v730
      %v792 = vpop.f32.mrf.mxu0
      %v793 = vadd.f32 0.0, %v792
      %794 = vmatmul.f32.gmra.mxu0 %v732
      %v795 = vpop.f32.mrf.mxu0
      %v796 = vadd.f32 0.0, %v795
      %797 = vmatmul.f32.gmra.mxu0 %v734
      %v798 = vpop.f32.mrf.mxu0
      %v799 = vadd.f32 0.0, %v798
      %800 = vdwg.mxu0
      %801 = vmatpush.msra.mxu0 0.0
      %802 = vmatpush.msra.mxu0 0.0
      %803 = vmatpush.msra.mxu0 0.0
      %804 = vmatpush.msra.mxu0 0.0
      %805 = vmatpush.msra.mxu0 0.0
      %806 = vmatpush.msra.mxu0 0.0
      %807 = vmatpush.msra.mxu0 0.0
      %808 = vmatpush.msra.mxu0 0.0
      %809 = vmatpush.msra.mxu0 0.0
      %810 = vmatpush.msra.mxu0 0.0
      %811 = vmatpush.msra.mxu0 0.0
      %812 = vmatpush.msra.mxu0 0.0
      %813 = vmatpush.msra.mxu0 %v699
      %814 = vmatpush.msra.mxu0 %v698
      %815 = vmatpush.msra.mxu0 %v697
      %816 = vmatpush.msra.mxu0 %v696
      %817 = vmatmul.f32.gmra.mxu0 %v342
      %v818 = vpop.f32.mrf.mxu0
      %v819 = vadd.f32 %v754, %v818
      %820 = vmatmul.f32.gmra.mxu0 %v345
      %v821 = vpop.f32.mrf.mxu0
      %v822 = vadd.f32 %v757, %v821
      %823 = vmatmul.f32.gmra.mxu0 %v348
      %v824 = vpop.f32.mrf.mxu0
      %v825 = vadd.f32 %v760, %v824
      %826 = vmatmul.f32.gmra.mxu0 %v351
      %v827 = vpop.f32.mrf.mxu0
      %v828 = vadd.f32 %v763, %v827
      %829 = vmatmul.f32.gmra.mxu0 %v354
      %v830 = vpop.f32.mrf.mxu0
      %v831 = vadd.f32 %v766, %v830
      %832 = vmatmul.f32.gmra.mxu0 %v357
      %v833 = vpop.f32.mrf.mxu0
      %v834 = vadd.f32 %v769, %v833
      %835 = vmatmul.f32.gmra.mxu0 %v360
      %v836 = vpop.f32.mrf.mxu0
      %v837 = vadd.f32 %v772, %v836
      %838 = vmatmul.f32.gmra.mxu0 %v363
      %v839 = vpop.f32.mrf.mxu0
      %v840 = vadd.f32 %v775, %v839
      %841 = vmatmul.f32.gmra.mxu0 %v366
      %v842 = vpop.f32.mrf.mxu0
      %v843 = vadd.f32 %v778, %v842
      %844 = vmatmul.f32.gmra.mxu0 %v369
      %v845 = vpop.f32.mrf.mxu0
      %v846 = vadd.f32 %v781, %v845
      %847 = vmatmul.f32.gmra.mxu0 %v372
      %v848 = vpop.f32.mrf.mxu0
      %v849 = vadd.f32 %v784, %v848
      %850 = vmatmul.f32.gmra.mxu0 %v375
      %v851 = vpop.f32.mrf.mxu0
      %v852 = vadd.f32 %v787, %v851
      %853 = vmatmul.f32.gmra.mxu0 %v378
      %v854 = vpop.f32.mrf.mxu0
      %v855 = vadd.f32 %v790, %v854
      %856 = vmatmul.f32.gmra.mxu0 %v381
      %v857 = vpop.f32.mrf.mxu0
      %v858 = vadd.f32 %v793, %v857
      %859 = vmatmul.f32.gmra.mxu0 %v384
      %v860 = vpop.f32.mrf.mxu0
      %v861 = vadd.f32 %v796, %v860
      %862 = vmatmul.f32.gmra.mxu0 %v387
      %v863 = vpop.f32.mrf.mxu0
      %v864 = vadd.f32 %v799, %v863
      %865 = vdwg.mxu0
      %v866 = vld [vmem:[%s6] sm:$0x1]
      %v868 = vperm.slane %v866, 0
      %v870 = vadd.f32 %v819, %v868
      %v871 = vadd.f32 %v822, %v868
      %v872 = vadd.f32 %v825, %v868
      %v873 = vadd.f32 %v828, %v868
      %v874 = vadd.f32 %v831, %v868
      %v875 = vadd.f32 %v834, %v868
      %v876 = vadd.f32 %v837, %v868
      %v877 = vadd.f32 %v840, %v868
      %v878 = vadd.f32 %v843, %v868
      %v879 = vadd.f32 %v846, %v868
      %v880 = vadd.f32 %v849, %v868
      %v881 = vadd.f32 %v852, %v868
      %v882 = vadd.f32 %v855, %v868
      %v883 = vadd.f32 %v858, %v868
      %v884 = vadd.f32 %v861, %v868
      %v885 = vadd.f32 %v864, %v868
      %886 = vmatpush.msra.mxu0 %v695
      %887 = vmatpush.msra.mxu0 %v694
      %888 = vmatpush.msra.mxu0 %v693
      %889 = vmatpush.msra.mxu0 %v692
      %890 = vmatpush.msra.mxu0 %v691
      %891 = vmatpush.msra.mxu0 %v690
      %892 = vmatpush.msra.mxu0 %v689
      %893 = vmatpush.msra.mxu0 %v688
      %894 = vmatpush.msra.mxu0 %v687
      %895 = vmatpush.msra.mxu0 %v686
      %896 = vmatpush.msra.mxu0 %v685
      %897 = vmatpush.msra.mxu0 %v684
      %898 = vmatpush.msra.mxu0 %v683
      %899 = vmatpush.msra.mxu0 %v682
      %900 = vmatpush.msra.mxu0 %v681
      %901 = vmatpush.msra.mxu0 %v680
      %902 = vmatmul.f32.gmra.mxu0 %v664
      %v903 = vpop.f32.mrf.mxu0
      %v904 = vadd.f32 %v870, %v903
      %905 = vmatmul.f32.gmra.mxu0 %v665
      %v906 = vpop.f32.mrf.mxu0
      %v907 = vadd.f32 %v871, %v906
      %908 = vmatmul.f32.gmra.mxu0 %v666
      %v909 = vpop.f32.mrf.mxu0
      %v910 = vadd.f32 %v872, %v909
      %911 = vmatmul.f32.gmra.mxu0 %v667
      %v912 = vpop.f32.mrf.mxu0
      %v913 = vadd.f32 %v873, %v912
      %914 = vmatmul.f32.gmra.mxu0 %v668
      %v915 = vpop.f32.mrf.mxu0
      %v916 = vadd.f32 %v874, %v915
      %917 = vmatmul.f32.gmra.mxu0 %v669
      %v918 = vpop.f32.mrf.mxu0
      %v919 = vadd.f32 %v875, %v918
      %920 = vmatmul.f32.gmra.mxu0 %v670
      %v921 = vpop.f32.mrf.mxu0
      %v922 = vadd.f32 %v876, %v921
      %923 = vmatmul.f32.gmra.mxu0 %v671
      %v924 = vpop.f32.mrf.mxu0
      %v925 = vadd.f32 %v877, %v924
      %926 = vmatmul.f32.gmra.mxu0 %v672
      %v927 = vpop.f32.mrf.mxu0
      %v928 = vadd.f32 %v878, %v927
      %929 = vmatmul.f32.gmra.mxu0 %v673
      %v930 = vpop.f32.mrf.mxu0
      %v931 = vadd.f32 %v879, %v930
      %932 = vmatmul.f32.gmra.mxu0 %v674
      %v933 = vpop.f32.mrf.mxu0
      %v934 = vadd.f32 %v880, %v933
      %935 = vmatmul.f32.gmra.mxu0 %v675
      %v936 = vpop.f32.mrf.mxu0
      %v937 = vadd.f32 %v881, %v936
      %938 = vmatmul.f32.gmra.mxu0 %v676
      %v939 = vpop.f32.mrf.mxu0
      %v940 = vadd.f32 %v882, %v939
      %941 = vmatmul.f32.gmra.mxu0 %v677
      %v942 = vpop.f32.mrf.mxu0
      %v943 = vadd.f32 %v883, %v942
      %944 = vmatmul.f32.gmra.mxu0 %v678
      %v945 = vpop.f32.mrf.mxu0
      %v946 = vadd.f32 %v884, %v945
      %947 = vmatmul.f32.gmra.mxu0 %v679
      %v948 = vpop.f32.mrf.mxu0
      %v949 = vadd.f32 %v885, %v948
      %950 = vdwg.mxu0
      %vm951 = vcmask 31744
      %952 = vst.msk [vmem:[%s302] sm:$0xff] %vm951, %v904
      %953 = vst.msk [vmem:[%s302 + $0x8] sm:$0xff] %vm951, %v907
      %954 = vst.msk [vmem:[%s302 + $0x10] sm:$0xff] %vm951, %v910
      %955 = vst.msk [vmem:[%s302 + $0x18] sm:$0xff] %vm951, %v913
      %956 = vst.msk [vmem:[%s302 + $0x20] sm:$0xff] %vm951, %v916
      %957 = vst.msk [vmem:[%s302 + $0x28] sm:$0xff] %vm951, %v919
      %958 = vst.msk [vmem:[%s302 + $0x30] sm:$0xff] %vm951, %v922
      %959 = vst.msk [vmem:[%s302 + $0x38] sm:$0xff] %vm951, %v925
      %960 = vst.msk [vmem:[%s302 + $0x40] sm:$0xff] %vm951, %v928
      %961 = vst.msk [vmem:[%s302 + $0x48] sm:$0xff] %vm951, %v931
      %962 = vst.msk [vmem:[%s302 + $0x50] sm:$0xff] %vm951, %v934
      %963 = vst.msk [vmem:[%s302 + $0x58] sm:$0xff] %vm951, %v937
      %964 = vst.msk [vmem:[%s302 + $0x60] sm:$0xff] %vm951, %v940
      %965 = vst.msk [vmem:[%s302 + $0x68] sm:$0xff] %vm951, %v943
      %966 = vst.msk [vmem:[%s302 + $0x70] sm:$0xff] %vm951, %v946
      %967 = vst.msk [vmem:[%s302 + $0x78] sm:$0xff] %vm951, %v949
      %s968 = smul.u32 16, %s18
      %p969 = scmp.lt.s32.totalorder %s968, 31
      %s970 = scalar_select %p969, %s968, 31
      %s971 = smul.addr %s970, 8
      %s972 = scalar_lea.vmem %s7, %s971
      // Predicated region
      $region49: #{tpu_custom_call.1} parent=47 // pred_check
        %p973 = pneg %p193
      $region50: #{tpu_custom_call.1} parent=47 // pred_check_branch
        %975 = sbr.rel (%p973) target = $region52
      $region51: #{tpu_custom_call.1} parent=47 // pred_region
        %s976 = smul.u32 16, %s18
      $region52: #{tpu_custom_call.1} parent=47 // pred_fallthru
        _
    $region48: #{tpu_custom_call.1} parent=5 // pred_fallthru
      _
    %p977 = scmp.le.s32.totalorder 2, %s13
    // Predicated region
    $region53: #{tpu_custom_call.1} parent=5 // pred_check
      %p978 = pneg %p977
    $region54: #{tpu_custom_call.1} parent=5 // pred_check_branch
      %980 = sbr.rel (%p978) target = $region56
    $region55: #{tpu_custom_call.1} parent=5 // pred_region
      %s981 = ssub.s32 %s13, 2
      // Predicated region
      $region57: #{tpu_custom_call.1} parent=55 // pred_check
        %p982 = pneg %p199
      $region58: #{tpu_custom_call.1} parent=55 // pred_check_branch
        %984 = sbr.rel (%p982) target = $region60
      $region59: #{tpu_custom_call.1} parent=55 // pred_region
        %s985 = smul.u32 16, %s19
        %p986 = scmp.lt.s32.totalorder %s985, 31
        %s987 = scalar_select %p986, %s985, 31
        %s988 = smul.addr %s987, 8
        %s989 = scalar_lea.vmem %s7, %s988
      $region60: #{tpu_custom_call.1} parent=55 // pred_fallthru
        _
    $region56: #{tpu_custom_call.1} parent=5 // pred_fallthru
      _
  $region6: #{tpu_custom_call.1} parent=0 // loop_footer
    %s17 = sadd.s32 1, %s13
  $region7: #{tpu_custom_call.1} parent=0 // loop_footer_branch
    %12 = sbr.rel target = $region3
  $region8: #{tpu_custom_call.1} parent=0 // loop_exit
    _

</llo_original>
